<compile_context>
chip_gen: v7x
topology: tpu7x:2x2x1
jax: 0.10.0
libtpu: 0.0.40
codegen_flags: <defaults>
</compile_context>

<pallas_src>
import functools

import jax
import jax.numpy as jnp
import numpy as np
from jax.experimental import pallas as pl
from jax.experimental.pallas import tpu as pltpu


def _cpe_kernel(xp_ref, w_ref, b_ref, o_ref, *, k: int, H: int, W: int):
    """Depthwise k x k stencil + bias + residual for one (n, channel-tile) block.

    xp_ref: (H+2p, W+2p, Ct) VMEM  -- spatially pre-padded NHWC slab
    w_ref : (k*k, Ct)        VMEM  -- per-channel depthwise weights (flattened taps)
    b_ref : (1, Ct)          VMEM  -- per-channel bias
    o_ref : (H, W, Ct)       VMEM  -- output slab (unpadded spatial extent)
    """
    pad = k // 2

    # Hoist parameter loads out of the tap loop (9 weight rows for k=3).
    w = w_ref[...].astype(jnp.float32)          # (k*k, Ct)
    b = b_ref[...].astype(jnp.float32)          # (1, Ct)

    # Center window == the original (unpadded) x: used for the residual and
    # reused as the center conv tap.
    x_center = xp_ref[pad:pad + H, pad:pad + W, :].astype(jnp.float32)

    # residual + bias, accumulated in f32.
    acc = x_center + b[0]

    for di in range(k):
        for dj in range(k):
            if di == pad and dj == pad:
                tap = x_center
            else:
                tap = xp_ref[di:di + H, dj:dj + W, :].astype(jnp.float32)
            acc = acc + tap * w[di * k + dj]    # (Ct,) broadcasts over lanes

    o_ref[...] = acc.astype(o_ref.dtype)


def conditional_position_encoding(x, weight, bias, *, c_tile_max=512):
    """x: (N, C, H, W); weight: (C, 1, k, k); bias: (C,).  Returns (N, C, H, W)."""
    N, C, H, W = x.shape
    k = weight.shape[-1]
    assert k % 2 == 1, "kernel_size must be odd"
    assert weight.shape == (C, 1, k, k)
    pad = k // 2

    # --- wrapper-side layout plumbing: NHWC, lane-dense channels, pre-pad ----
    C_pad = ((C + 127) // 128) * 128
    x_nhwc = jnp.transpose(x, (0, 2, 3, 1))                       # (N, H, W, C)
    xp = jnp.pad(x_nhwc, ((0, 0), (pad, pad), (pad, pad), (0, C_pad - C)))

    # weights -> (k*k, C_pad) f32; bias -> (1, C_pad) f32.
    w_kk_c = jnp.pad(weight.reshape(C, k * k).T.astype(jnp.float32),
                     ((0, 0), (0, C_pad - C)))
    b_1c = jnp.pad(bias.reshape(1, C).astype(jnp.float32),
                   ((0, 0), (0, C_pad - C)))

    # --- channel tile: biggest multiple of 128 that divides C_pad and keeps ---
    # the per-block input slab under a conservative VMEM budget (v7x-safe).
    bytes_per_chan = (H + 2 * pad) * (W + 2 * pad) * 4            # f32 upper bound
    budget = 8 * 1024 * 1024
    c_tile = 128
    cand = min(C_pad, c_tile_max)
    while cand >= 128:
        if C_pad % cand == 0 and cand * bytes_per_chan <= budget:
            c_tile = cand
            break
        cand -= 128

    kernel = functools.partial(_cpe_kernel, k=k, H=H, W=W)

    out_nhwc = pl.pallas_call(
        kernel,
        out_shape=jax.ShapeDtypeStruct((N, H, W, C_pad), x.dtype),
        grid=(N, C_pad // c_tile),
        in_specs=[
            # Full padded spatial plane, one channel tile. N axis squeezed.
            pl.BlockSpec((None, H + 2 * pad, W + 2 * pad, c_tile),
                         lambda n, c: (n, 0, 0, c)),
            pl.BlockSpec((k * k, c_tile), lambda n, c: (0, c)),
            pl.BlockSpec((1, c_tile), lambda n, c: (0, c)),
        ],
        out_specs=pl.BlockSpec((None, H, W, c_tile), lambda n, c: (n, 0, 0, c)),
        compiler_params=pltpu.CompilerParams(
            dimension_semantics=("parallel", "parallel")),
    )(xp, w_kk_c, b_1c)

    # Drop channel padding, back to NCHW.
    return jnp.transpose(out_nhwc[..., :C], (0, 3, 1, 2))


def _reference(x, weight, bias):
    """Pure-JAX reference: depthwise conv2d + bias + residual (NCHW)."""
    C = x.shape[1]
    k = weight.shape[-1]
    pe = jax.lax.conv_general_dilated(
        x.astype(jnp.float32),
        weight.astype(jnp.float32),
        window_strides=(1, 1),
        padding=[(k // 2, k // 2), (k // 2, k // 2)],
        dimension_numbers=("NCHW", "OIHW", "NCHW"),
        feature_group_count=C,
    )
    pe = pe + bias.astype(jnp.float32)[None, :, None, None]
    return (pe + x.astype(jnp.float32)).astype(x.dtype)


if __name__ == "__main__":
    N, C, H, W = 2, 4, 16, 16
    k = 3

    key = jax.random.PRNGKey(0)
    kx, kw, kb = jax.random.split(key, 3)
    x = jax.random.normal(kx, (N, C, H, W), dtype=jnp.float32)
    # Depthwise conv parameters per nn.Conv2d(groups=in_channels):
    # weight (C, 1, k, k), bias (C,).
    weight = jax.random.normal(kw, (C, 1, k, k), dtype=jnp.float32) * 0.1
    bias = jax.random.normal(kb, (C,), dtype=jnp.float32) * 0.1

    out = conditional_position_encoding(x, weight, bias)
    out = jax.block_until_ready(out)

    ref = _reference(x, weight, bias)
    np.testing.assert_allclose(np.asarray(out), np.asarray(ref),
                               rtol=1e-5, atol=1e-5)
    print("KERNEL_OK")
</pallas_src>

<mosaic_0001>
module attributes {stable_mosaic.version = 11 : i64} {
  func.func @_cpe_kernel(%arg0: i32, %arg1: i32, %arg2: memref<1x18x18x128xf32, #tpu.memory_space<vmem>>, %arg3: memref<9x128xf32, #tpu.memory_space<vmem>>, %arg4: memref<1x128xf32, #tpu.memory_space<vmem>>, %arg5: memref<1x16x16x128xf32, #tpu.memory_space<vmem>>) attributes {dimension_semantics = [#tpu.dimension_semantics<parallel>, #tpu.dimension_semantics<parallel>], iteration_bounds = array<i64: 2, 1>, scalar_prefetch = 0 : i64, scratch_operands = 0 : i64, tpu.core_type = #tpu.core_type<tc>, window_params = [{transform_indices = @transform_0, window_bounds = array<i64: 1, 18, 18, 128>}, {transform_indices = @transform_1, window_bounds = array<i64: 9, 128>}, {transform_indices = @transform_2, window_bounds = array<i64: 1, 128>}, {transform_indices = @transform_3, window_bounds = array<i64: 1, 16, 16, 128>}]} {
    %c0 = arith.constant 0 : index
    %c0_0 = arith.constant 0 : index
    %0 = vector.load %arg3[%c0, %c0_0] : memref<9x128xf32, #tpu.memory_space<vmem>>, vector<9x128xf32>
    %c0_1 = arith.constant 0 : index
    %c0_2 = arith.constant 0 : index
    %1 = vector.load %arg4[%c0_1, %c0_2] : memref<1x128xf32, #tpu.memory_space<vmem>>, vector<1x128xf32>
    %c0_3 = arith.constant 0 : index
    %c1 = arith.constant 1 : index
    %c1_4 = arith.constant 1 : index
    %c0_5 = arith.constant 0 : index
    %2 = vector.load %arg2[%c0_3, %c1, %c1_4, %c0_5] : memref<1x18x18x128xf32, #tpu.memory_space<vmem>>, vector<1x16x16x128xf32>
    %3 = vector.shape_cast %2 : vector<1x16x16x128xf32> to vector<16x16x128xf32>
    %4 = vector.shape_cast %1 : vector<1x128xf32> to vector<128xf32>
    %5 = vector.shape_cast %4 : vector<128xf32> to vector<1x1x128xf32>
    %6 = vector.broadcast %5 : vector<1x1x128xf32> to vector<16x16x128xf32>
    %7 = arith.addf %3, %6 : vector<16x16x128xf32>
    %c0_6 = arith.constant 0 : index
    %c0_7 = arith.constant 0 : index
    %c0_8 = arith.constant 0 : index
    %c0_9 = arith.constant 0 : index
    %8 = vector.load %arg2[%c0_6, %c0_7, %c0_8, %c0_9] : memref<1x18x18x128xf32, #tpu.memory_space<vmem>>, vector<1x16x16x128xf32>
    %9 = vector.shape_cast %8 : vector<1x16x16x128xf32> to vector<16x16x128xf32>
    %10 = vector.extract_strided_slice %0 {offsets = [0, 0], sizes = [1, 128], strides = [1, 1]} : vector<9x128xf32> to vector<1x128xf32>
    %11 = vector.shape_cast %10 : vector<1x128xf32> to vector<128xf32>
    %12 = vector.shape_cast %11 : vector<128xf32> to vector<1x1x128xf32>
    %13 = vector.broadcast %12 : vector<1x1x128xf32> to vector<16x16x128xf32>
    %14 = arith.mulf %9, %13 : vector<16x16x128xf32>
    %15 = arith.addf %7, %14 : vector<16x16x128xf32>
    %c0_10 = arith.constant 0 : index
    %c0_11 = arith.constant 0 : index
    %c1_12 = arith.constant 1 : index
    %c0_13 = arith.constant 0 : index
    %16 = vector.load %arg2[%c0_10, %c0_11, %c1_12, %c0_13] : memref<1x18x18x128xf32, #tpu.memory_space<vmem>>, vector<1x16x16x128xf32>
    %17 = vector.shape_cast %16 : vector<1x16x16x128xf32> to vector<16x16x128xf32>
    %18 = vector.extract_strided_slice %0 {offsets = [1, 0], sizes = [1, 128], strides = [1, 1]} : vector<9x128xf32> to vector<1x128xf32>
    %19 = vector.shape_cast %18 : vector<1x128xf32> to vector<128xf32>
    %20 = vector.shape_cast %19 : vector<128xf32> to vector<1x1x128xf32>
    %21 = vector.broadcast %20 : vector<1x1x128xf32> to vector<16x16x128xf32>
    %22 = arith.mulf %17, %21 : vector<16x16x128xf32>
    %23 = arith.addf %15, %22 : vector<16x16x128xf32>
    %c0_14 = arith.constant 0 : index
    %c0_15 = arith.constant 0 : index
    %c2 = arith.constant 2 : index
    %c0_16 = arith.constant 0 : index
    %24 = vector.load %arg2[%c0_14, %c0_15, %c2, %c0_16] : memref<1x18x18x128xf32, #tpu.memory_space<vmem>>, vector<1x16x16x128xf32>
    %25 = vector.shape_cast %24 : vector<1x16x16x128xf32> to vector<16x16x128xf32>
    %26 = vector.extract_strided_slice %0 {offsets = [2, 0], sizes = [1, 128], strides = [1, 1]} : vector<9x128xf32> to vector<1x128xf32>
    %27 = vector.shape_cast %26 : vector<1x128xf32> to vector<128xf32>
    %28 = vector.shape_cast %27 : vector<128xf32> to vector<1x1x128xf32>
    %29 = vector.broadcast %28 : vector<1x1x128xf32> to vector<16x16x128xf32>
    %30 = arith.mulf %25, %29 : vector<16x16x128xf32>
    %31 = arith.addf %23, %30 : vector<16x16x128xf32>
    %c0_17 = arith.constant 0 : index
    %c1_18 = arith.constant 1 : index
    %c0_19 = arith.constant 0 : index
    %c0_20 = arith.constant 0 : index
    %32 = vector.load %arg2[%c0_17, %c1_18, %c0_19, %c0_20] : memref<1x18x18x128xf32, #tpu.memory_space<vmem>>, vector<1x16x16x128xf32>
    %33 = vector.shape_cast %32 : vector<1x16x16x128xf32> to vector<16x16x128xf32>
    %34 = vector.extract_strided_slice %0 {offsets = [3, 0], sizes = [1, 128], strides = [1, 1]} : vector<9x128xf32> to vector<1x128xf32>
    %35 = vector.shape_cast %34 : vector<1x128xf32> to vector<128xf32>
    %36 = vector.shape_cast %35 : vector<128xf32> to vector<1x1x128xf32>
    %37 = vector.broadcast %36 : vector<1x1x128xf32> to vector<16x16x128xf32>
    %38 = arith.mulf %33, %37 : vector<16x16x128xf32>
    %39 = arith.addf %31, %38 : vector<16x16x128xf32>
    %40 = vector.extract_strided_slice %0 {offsets = [4, 0], sizes = [1, 128], strides = [1, 1]} : vector<9x128xf32> to vector<1x128xf32>
    %41 = vector.shape_cast %40 : vector<1x128xf32> to vector<128xf32>
    %42 = vector.shape_cast %41 : vector<128xf32> to vector<1x1x128xf32>
    %43 = vector.broadcast %42 : vector<1x1x128xf32> to vector<16x16x128xf32>
    %44 = arith.mulf %3, %43 : vector<16x16x128xf32>
    %45 = arith.addf %39, %44 : vector<16x16x128xf32>
    %c0_21 = arith.constant 0 : index
    %c1_22 = arith.constant 1 : index
    %c2_23 = arith.constant 2 : index
    %c0_24 = arith.constant 0 : index
    %46 = vector.load %arg2[%c0_21, %c1_22, %c2_23, %c0_24] : memref<1x18x18x128xf32, #tpu.memory_space<vmem>>, vector<1x16x16x128xf32>
    %47 = vector.shape_cast %46 : vector<1x16x16x128xf32> to vector<16x16x128xf32>
    %48 = vector.extract_strided_slice %0 {offsets = [5, 0], sizes = [1, 128], strides = [1, 1]} : vector<9x128xf32> to vector<1x128xf32>
    %49 = vector.shape_cast %48 : vector<1x128xf32> to vector<128xf32>
    %50 = vector.shape_cast %49 : vector<128xf32> to vector<1x1x128xf32>
    %51 = vector.broadcast %50 : vector<1x1x128xf32> to vector<16x16x128xf32>
    %52 = arith.mulf %47, %51 : vector<16x16x128xf32>
    %53 = arith.addf %45, %52 : vector<16x16x128xf32>
    %c0_25 = arith.constant 0 : index
    %c2_26 = arith.constant 2 : index
    %c0_27 = arith.constant 0 : index
    %c0_28 = arith.constant 0 : index
    %54 = vector.load %arg2[%c0_25, %c2_26, %c0_27, %c0_28] : memref<1x18x18x128xf32, #tpu.memory_space<vmem>>, vector<1x16x16x128xf32>
    %55 = vector.shape_cast %54 : vector<1x16x16x128xf32> to vector<16x16x128xf32>
    %56 = vector.extract_strided_slice %0 {offsets = [6, 0], sizes = [1, 128], strides = [1, 1]} : vector<9x128xf32> to vector<1x128xf32>
    %57 = vector.shape_cast %56 : vector<1x128xf32> to vector<128xf32>
    %58 = vector.shape_cast %57 : vector<128xf32> to vector<1x1x128xf32>
    %59 = vector.broadcast %58 : vector<1x1x128xf32> to vector<16x16x128xf32>
    %60 = arith.mulf %55, %59 : vector<16x16x128xf32>
    %61 = arith.addf %53, %60 : vector<16x16x128xf32>
    %c0_29 = arith.constant 0 : index
    %c2_30 = arith.constant 2 : index
    %c1_31 = arith.constant 1 : index
    %c0_32 = arith.constant 0 : index
    %62 = vector.load %arg2[%c0_29, %c2_30, %c1_31, %c0_32] : memref<1x18x18x128xf32, #tpu.memory_space<vmem>>, vector<1x16x16x128xf32>
    %63 = vector.shape_cast %62 : vector<1x16x16x128xf32> to vector<16x16x128xf32>
    %64 = vector.extract_strided_slice %0 {offsets = [7, 0], sizes = [1, 128], strides = [1, 1]} : vector<9x128xf32> to vector<1x128xf32>
    %65 = vector.shape_cast %64 : vector<1x128xf32> to vector<128xf32>
    %66 = vector.shape_cast %65 : vector<128xf32> to vector<1x1x128xf32>
    %67 = vector.broadcast %66 : vector<1x1x128xf32> to vector<16x16x128xf32>
    %68 = arith.mulf %63, %67 : vector<16x16x128xf32>
    %69 = arith.addf %61, %68 : vector<16x16x128xf32>
    %c0_33 = arith.constant 0 : index
    %c2_34 = arith.constant 2 : index
    %c2_35 = arith.constant 2 : index
    %c0_36 = arith.constant 0 : index
    %70 = vector.load %arg2[%c0_33, %c2_34, %c2_35, %c0_36] : memref<1x18x18x128xf32, #tpu.memory_space<vmem>>, vector<1x16x16x128xf32>
    %71 = vector.shape_cast %70 : vector<1x16x16x128xf32> to vector<16x16x128xf32>
    %72 = vector.extract_strided_slice %0 {offsets = [8, 0], sizes = [1, 128], strides = [1, 1]} : vector<9x128xf32> to vector<1x128xf32>
    %73 = vector.shape_cast %72 : vector<1x128xf32> to vector<128xf32>
    %74 = vector.shape_cast %73 : vector<128xf32> to vector<1x1x128xf32>
    %75 = vector.broadcast %74 : vector<1x1x128xf32> to vector<16x16x128xf32>
    %76 = arith.mulf %71, %75 : vector<16x16x128xf32>
    %77 = arith.addf %69, %76 : vector<16x16x128xf32>
    %c0_37 = arith.constant 0 : index
    %c0_38 = arith.constant 0 : index
    %c0_39 = arith.constant 0 : index
    %c0_40 = arith.constant 0 : index
    %78 = vector.load %arg5[%c0_37, %c0_38, %c0_39, %c0_40] : memref<1x16x16x128xf32, #tpu.memory_space<vmem>>, vector<1x16x16x128xf32>
    %79 = vector.shape_cast %78 : vector<1x16x16x128xf32> to vector<16x16x128xf32>
    %80 = vector.shape_cast %77 : vector<16x16x128xf32> to vector<1x16x16x128xf32>
    tpu.vector_store %arg5[%c0_37, %c0_38, %c0_39, %c0_40], %80 {strides = array<i32>} : memref<1x16x16x128xf32, #tpu.memory_space<vmem>>, vector<1x16x16x128xf32>,
    return
  }
  func.func @transform_0(%arg0: i32, %arg1: i32) -> (i32, i32, i32, i32) {
    %c0_i32 = arith.constant 0 : i32
    %c0_i32_0 = arith.constant 0 : i32
    %c0_i32_1 = arith.constant 0 : i32
    return %arg0, %c0_i32, %c0_i32_0, %arg1 : i32, i32, i32, i32
  }
  func.func @transform_1(%arg0: i32, %arg1: i32) -> (i32, i32) {
    %c0_i32 = arith.constant 0 : i32
    %c0_i32_0 = arith.constant 0 : i32
    return %c0_i32, %arg1 : i32, i32
  }
  func.func @transform_2(%arg0: i32, %arg1: i32) -> (i32, i32) {
    %c0_i32 = arith.constant 0 : i32
    %c0_i32_0 = arith.constant 0 : i32
    return %c0_i32, %arg1 : i32, i32
  }
  func.func @transform_3(%arg0: i32, %arg1: i32) -> (i32, i32, i32, i32) {
    %c0_i32 = arith.constant 0 : i32
    %c0_i32_0 = arith.constant 0 : i32
    %c0_i32_1 = arith.constant 0 : i32
    return %arg0, %c0_i32, %c0_i32_0, %arg1 : i32, i32, i32, i32
  }
}

</mosaic_0001>

<llo_original>
// kernel: tpu_custom_call.1
$region0: #{tpu_custom_call.1}
  #allocation0 [shape = 'u32[]', space=smem, size = 0x4, offset = 0x4, fixed_abs, tag = 'smem constant byte address 0x4 - core index']
  #allocation1 [shape = 'u32[144,128]{1,0:T(1,128)}', space=vmem, size = 0x12000, scoped, tag = 'internal scratch']
  %s0 = inlined_call_operand.vmem [shape: f32[2,18,18,128], index: 0, kind: input, shape index: {}]
  %s1 = inlined_call_operand.vmem [shape: f32[9,128], index: 1, kind: input, shape index: {}]
  %s2 = inlined_call_operand.vmem [shape: f32[1,128], index: 2, kind: input, shape index: {}]
  %s3 = inlined_call_operand.hbm [shape: f32[2,16,16,128], index: 3, kind: output, shape index: {}]
  %s4 = sld [smem:[#allocation0]]
  $region45: #{tpu_custom_call.1} parent=0
    _
  %s6 = ssub.s32 1, %s4
  %s7 = scalar_select 0, %s6, %s4
  $region1: #{tpu_custom_call.1} parent=0
    #allocation2 [shape = 'u8[262144]{0}', space=vmem, size = 0x40000, scoped, tag = 'output window, operand 0']
    #allocation3 [shape = 's32[2]{0}', space=sflag, size = 0x8, scoped, tag = 'scoped memory for tpu_custom_call.1']
    %8 = vsyncpa [#allocation3], 0
    %s9 = scalar_lea.sflag [#allocation3], 1
    %10 = vsyncpa %s9, 0
    loop: start=0, step=1, limit=4
    $region2: #{tpu_custom_call.1} parent=1 // loop_pre_header
      _
    $region3: #{tpu_custom_call.1} parent=1 // loop_header
      %s12 = sphi 0, %s16
      %p13 = scmp.ge.s32.totalorder %s12, 4
      %s19 = sphi 0, %s31
      %s20 = sphi 0, %s27
      %s21 = sphi 0, %s19
      %s22 = sphi 0, %s20
      %s23 = sphi 0, %s21
      %s24 = sphi 0, %s22
      %s36 = sphi 0, %s38
      %s39 = sphi 0, %s36
      %s40 = sphi 0, %s39
      %s56 = sphi 0, %s40
      %s62 = sphi 0, %s64
      %s65 = sphi 0, %s62
      %s66 = sphi 0, %s65
      %s82 = sphi 0, %s66
      %s88 = sphi 0, %s90
      %s91 = sphi 0, %s88
      %s92 = sphi 0, %s91
      %s108 = sphi 0, %s92
      %s116 = sphi 0, %s118
      %s119 = sphi 0, %s116
      %s120 = sphi 0, %s119
      %s136 = sphi 0, %s120
    $region4: #{tpu_custom_call.1} parent=1 // loop_header_branch
      %15 = sbr.rel (%p13) target = $region8
    $region5: #{tpu_custom_call.1} parent=1 // loop_body
      %s17 = ssub.s32 %s12, 1
      %s18 = ssub.s32 %s12, 2
      %s25 = sadd.s32 1, %s20
      %p26 = scmp.ge.s32.totalorder %s25, 1
      %s27 = scalar_select %p26, 0, %s25
      %s28 = sadd.s32 1, %s19
      %s29 = scalar_select %p26, %s28, %s19
      %p30 = scmp.ge.s32.totalorder %s29, 2
      %s31 = scalar_select %p30, 0, %s29
      %s32 = ssub.s32 %s19, %s31
      %s33 = ssub.s32 %s20, %s27
      %s34 = sor.u32 %s32, %s33
      %p35 = scmp.eq.s32.totalorder %s34, 0
      %s37 = sadd.s32 %s36, 1
      %s38 = scalar_select %p35, %s36, %s37
      %p41 = pneg %p35
      %p42 = scmp.eq.s32.totalorder %s12, 1
      %p43 = por %p41, %p42
      %p44 = scmp.ne.s32.totalorder %s36, %s39
      %p45 = scmp.eq.s32.totalorder %s12, 0
      %p46 = por %p44, %p45
      %p47 = scmp.ne.s32.totalorder %s36, %s39
      %p48 = scmp.eq.s32.totalorder %s17, 1
      %p49 = por %p47, %p48
      %p50 = scmp.ne.s32.totalorder %s39, %s40
      %p51 = scmp.eq.s32.totalorder %s17, 0
      %p52 = por %p50, %p51
      %p53 = scmp.ne.s32.totalorder %s39, %s40
      %p54 = scmp.eq.s32.totalorder %s18, 1
      %p55 = por %p53, %p54
      %p57 = scmp.ne.s32.totalorder %s40, %s56
      %p58 = scmp.eq.s32.totalorder %s18, 0
      %p59 = por %p57, %p58
      %s60 = ssub.s32 %s20, %s27
      %p61 = scmp.eq.s32.totalorder %s60, 0
      %s63 = sadd.s32 %s62, 1
      %s64 = scalar_select %p61, %s62, %s63
      %p67 = pneg %p61
      %p68 = scmp.eq.s32.totalorder %s12, 1
      %p69 = por %p67, %p68
      %p70 = scmp.ne.s32.totalorder %s62, %s65
      %p71 = scmp.eq.s32.totalorder %s12, 0
      %p72 = por %p70, %p71
      %p73 = scmp.ne.s32.totalorder %s62, %s65
      %p74 = scmp.eq.s32.totalorder %s17, 1
      %p75 = por %p73, %p74
      %p76 = scmp.ne.s32.totalorder %s65, %s66
      %p77 = scmp.eq.s32.totalorder %s17, 0
      %p78 = por %p76, %p77
      %p79 = scmp.ne.s32.totalorder %s65, %s66
      %p80 = scmp.eq.s32.totalorder %s18, 1
      %p81 = por %p79, %p80
      %p83 = scmp.ne.s32.totalorder %s66, %s82
      %p84 = scmp.eq.s32.totalorder %s18, 0
      %p85 = por %p83, %p84
      %s86 = ssub.s32 %s20, %s27
      %p87 = scmp.eq.s32.totalorder %s86, 0
      %s89 = sadd.s32 %s88, 1
      %s90 = scalar_select %p87, %s88, %s89
      %p93 = pneg %p87
      %p94 = scmp.eq.s32.totalorder %s12, 1
      %p95 = por %p93, %p94
      %p96 = scmp.ne.s32.totalorder %s88, %s91
      %p97 = scmp.eq.s32.totalorder %s12, 0
      %p98 = por %p96, %p97
      %p99 = scmp.ne.s32.totalorder %s88, %s91
      %p100 = scmp.eq.s32.totalorder %s17, 1
      %p101 = por %p99, %p100
      %p102 = scmp.ne.s32.totalorder %s91, %s92
      %p103 = scmp.eq.s32.totalorder %s17, 0
      %p104 = por %p102, %p103
      %p105 = scmp.ne.s32.totalorder %s91, %s92
      %p106 = scmp.eq.s32.totalorder %s18, 1
      %p107 = por %p105, %p106
      %p109 = scmp.ne.s32.totalorder %s92, %s108
      %p110 = scmp.eq.s32.totalorder %s18, 0
      %p111 = por %p109, %p110
      %s112 = ssub.s32 %s19, %s31
      %s113 = ssub.s32 %s20, %s27
      %s114 = sor.u32 %s112, %s113
      %p115 = scmp.eq.s32.totalorder %s114, 0
      %s117 = sadd.s32 %s116, 1
      %s118 = scalar_select %p115, %s116, %s117
      %p121 = pneg %p115
      %p122 = scmp.eq.s32.totalorder %s12, 1
      %p123 = por %p121, %p122
      %p124 = scmp.ne.s32.totalorder %s116, %s119
      %p125 = scmp.eq.s32.totalorder %s12, 0
      %p126 = por %p124, %p125
      %p127 = scmp.ne.s32.totalorder %s116, %s119
      %p128 = scmp.eq.s32.totalorder %s17, 1
      %p129 = por %p127, %p128
      %p130 = scmp.ne.s32.totalorder %s119, %s120
      %p131 = scmp.eq.s32.totalorder %s17, 0
      %p132 = por %p130, %p131
      %p133 = scmp.ne.s32.totalorder %s119, %s120
      %p134 = scmp.eq.s32.totalorder %s18, 1
      %p135 = por %p133, %p134
      %p137 = scmp.ne.s32.totalorder %s120, %s136
      %p138 = scmp.eq.s32.totalorder %s18, 0
      %p139 = por %p137, %p138
      %p140 = scmp.le.s32.totalorder 1, %s12
      %p141 = scmp.lt.s32.totalorder %s12, 3
      %p142 = pnand %p140, %p141
      %p143 = pneg %p142
      // Predicated region
      $region9: #{tpu_custom_call.1} parent=5 // pred_check
        _
      $region10: #{tpu_custom_call.1} parent=5 // pred_check_branch
        %145 = sbr.rel (%p142) target = $region12
      $region11: #{tpu_custom_call.1} parent=5 // pred_region
        %s146 = ssub.s32 %s12, 1
        // Predicated region
        $region13: #{tpu_custom_call.1} parent=11 // pred_check
          %p147 = pneg %p78
        $region14: #{tpu_custom_call.1} parent=11 // pred_check_branch
          %149 = sbr.rel (%p147) target = $region16
        $region15: #{tpu_custom_call.1} parent=11 // pred_region
          %p150 = scmp.lt.s32.totalorder %s22, 0
          %s151 = scalar_select %p150, %s22, 0
          %s152 = smul.addr %s151, 8
          %s153 = scalar_lea.vmem %s1, %s152
        $region16: #{tpu_custom_call.1} parent=11 // pred_fallthru
          _
        // Predicated region
        $region17: #{tpu_custom_call.1} parent=11 // pred_check
          %p154 = pneg %p104
        $region18: #{tpu_custom_call.1} parent=11 // pred_check_branch
          %156 = sbr.rel (%p154) target = $region20
        $region19: #{tpu_custom_call.1} parent=11 // pred_region
          %p157 = scmp.lt.s32.totalorder %s22, 0
          %s158 = scalar_select %p157, %s22, 0
          %s159 = scalar_lea.vmem %s2, %s158
        $region20: #{tpu_custom_call.1} parent=11 // pred_fallthru
          _
      $region12: #{tpu_custom_call.1} parent=5 // pred_fallthru
        _
      %p160 = scmp.lt.s32.totalorder %s12, 2
      // Predicated region
      $region21: #{tpu_custom_call.1} parent=5 // pred_check
        %p161 = pneg %p160
      $region22: #{tpu_custom_call.1} parent=5 // pred_check_branch
        %163 = sbr.rel (%p161) target = $region24
      $region23: #{tpu_custom_call.1} parent=5 // pred_region
        // Predicated region
        $region25: #{tpu_custom_call.1} parent=23 // pred_check
          %p164 = pneg %p46
        $region26: #{tpu_custom_call.1} parent=23 // pred_check_branch
          %166 = sbr.rel (%p164) target = $region28
        $region27: #{tpu_custom_call.1} parent=23 // pred_region
          %p167 = scmp.lt.s32.totalorder %s19, 1
          %s168 = scalar_select %p167, %s19, 1
          %p169 = scmp.lt.s32.totalorder %s20, 0
          %s170 = scalar_select %p169, %s20, 0
          %s171 = smul.addr %s168, 54
          %s172 = sadd.s32 %s170, %s171
          %s173 = smul.addr %s172, 8
          %s174 = scalar_lea.vmem %s0, %s173
        $region28: #{tpu_custom_call.1} parent=23 // pred_fallthru
          _
      $region24: #{tpu_custom_call.1} parent=5 // pred_fallthru
        _
      %p175 = scmp.le.s32.totalorder 1, %s12
      %p176 = scmp.lt.s32.totalorder %s12, 3
      %p177 = pnand %p175, %p176
      %p178 = pneg %p177
      // Predicated region
      $region29: #{tpu_custom_call.1} parent=5 // pred_check
        _
      $region30: #{tpu_custom_call.1} parent=5 // pred_check_branch
        %180 = sbr.rel (%p177) target = $region32
      $region31: #{tpu_custom_call.1} parent=5 // pred_region
        %s181 = ssub.s32 %s12, 1
        %p182 = scmp.lt.s32.totalorder %s21, 1
        %s183 = scalar_select %p182, %s21, 1
        %p184 = scmp.lt.s32.totalorder %s22, 0
        %s185 = scalar_select %p184, %s22, 0
        %s186 = smul.addr %s183, 54
        %s187 = sadd.s32 %s185, %s186
        %s188 = smul.addr %s187, 8
        %s189 = scalar_lea.vmem %s0, %s188
        %p190 = pneg %p52
        %p191 = pneg %p49
        %p192 = scmp.lt.s32.totalorder %s22, 0
        %s193 = scalar_select %p192, %s22, 0
        %s194 = smul.addr %s193, 8
        %s195 = scalar_lea.vmem %s1, %s194
        %p196 = pneg %p78
        %p197 = pneg %p75
        %p198 = scmp.lt.s32.totalorder %s22, 0
        %s199 = scalar_select %p198, %s22, 0
        %s200 = scalar_lea.vmem %s2, %s199
        %p201 = pneg %p104
        %p202 = pneg %p101
        %p203 = pneg %p132
        %p204 = pneg %p129
        %s205 = sand.u32 %s119, 1
        %s206 = scalar_lea.sflag [#allocation3], %s205
        %s207 = sand.u32 %s119, 1
        %s208 = smul.addr %s207, 256
        %s209 = scalar_lea.vmem [#allocation2], %s208
        %p210 = scmp.lt.s32.totalorder %s21, 1
        %s211 = scalar_select %p210, %s21, 1
        %p212 = scmp.lt.s32.totalorder %s22, 0
        %s213 = scalar_select %p212, %s22, 0
        %s214 = smul.addr %s211, 54
        %s215 = sadd.s32 %s213, %s214
        %s216 = smul.addr %s215, 8
        %s217 = scalar_lea.vmem %s0, %s216
        %p218 = scmp.lt.s32.totalorder %s22, 0
        %s219 = scalar_select %p218, %s22, 0
        %s220 = smul.addr %s219, 8
        %s221 = scalar_lea.vmem %s1, %s220
        %p222 = scmp.lt.s32.totalorder %s22, 0
        %s223 = scalar_select %p222, %s22, 0
        %s224 = scalar_lea.vmem %s2, %s223
        %v225 = vld [vmem:[%s221] sm:$0xff]
        %v226 = vld [vmem:[%s221 + $0x8] sm:$0x1]
        %v227 = vld [vmem:[%s224] sm:$0x1]
        %s228 = scalar_lea.vmem %s217, 24
        %v229 = vld [vmem:[%s228 + $0x1] sm:$0xff]
        %v230 = vld [vmem:[%s228 + $0x9] sm:$0xff]
        %v231 = vld [vmem:[%s228 + $0x19] sm:$0xff]
        %v232 = vld [vmem:[%s228 + $0x21] sm:$0xff]
        %v233 = vld [vmem:[%s228 + $0x31] sm:$0xff]
        %v234 = vld [vmem:[%s228 + $0x39] sm:$0xff]
        %v235 = vld [vmem:[%s228 + $0x49] sm:$0xff]
        %v236 = vld [vmem:[%s228 + $0x51] sm:$0xff]
        %v237 = vld [vmem:[%s228 + $0x61] sm:$0xff]
        %v238 = vld [vmem:[%s228 + $0x69] sm:$0xff]
        %v239 = vld [vmem:[%s228 + $0x79] sm:$0xff]
        %v240 = vld [vmem:[%s228 + $0x81] sm:$0xff]
        %v241 = vld [vmem:[%s228 + $0x91] sm:$0xff]
        %v242 = vld [vmem:[%s228 + $0x99] sm:$0xff]
        %v243 = vld [vmem:[%s228 + $0xa9] sm:$0xff]
        %v244 = vld [vmem:[%s228 + $0xb1] sm:$0xff]
        %v245 = vld [vmem:[%s228 + $0xc1] sm:$0xff]
        %v246 = vld [vmem:[%s228 + $0xc9] sm:$0xff]
        %v247 = vld [vmem:[%s228 + $0xd9] sm:$0xff]
        %v248 = vld [vmem:[%s228 + $0xe1] sm:$0xff]
        %v249 = vld [vmem:[%s228 + $0xf1] sm:$0xff]
        %v250 = vld [vmem:[%s228 + $0xf9] sm:$0xff]
        %v251 = vld [vmem:[%s228 + $0x109] sm:$0xff]
        %v252 = vld [vmem:[%s228 + $0x111] sm:$0xff]
        %v253 = vld [vmem:[%s228 + $0x121] sm:$0xff]
        %v254 = vld [vmem:[%s228 + $0x129] sm:$0xff]
        %v255 = vld [vmem:[%s228 + $0x139] sm:$0xff]
        %v256 = vld [vmem:[%s228 + $0x141] sm:$0xff]
        %v257 = vld [vmem:[%s228 + $0x151] sm:$0xff]
        %v258 = vld [vmem:[%s228 + $0x159] sm:$0xff]
        %v259 = vld [vmem:[%s228 + $0x169] sm:$0xff]
        %v260 = vld [vmem:[%s228 + $0x171] sm:$0xff]
        %v262 = vlaneseq
        %v263 = vshrl.u32 %v262, 7
        %v264 = vsub.s32 0, %v263
        %v265 = vrot.slane %v227, %v264
        %v267 = vadd.f32 %v229, %v265
        %v268 = vadd.f32 %v230, %v265
        %v269 = vadd.f32 %v231, %v265
        %v270 = vadd.f32 %v232, %v265
        %v271 = vadd.f32 %v233, %v265
        %v272 = vadd.f32 %v234, %v265
        %v273 = vadd.f32 %v235, %v265
        %v274 = vadd.f32 %v236, %v265
        %v275 = vadd.f32 %v237, %v265
        %v276 = vadd.f32 %v238, %v265
        %v277 = vadd.f32 %v239, %v265
        %v278 = vadd.f32 %v240, %v265
        %v279 = vadd.f32 %v241, %v265
        %v280 = vadd.f32 %v242, %v265
        %v281 = vadd.f32 %v243, %v265
        %v282 = vadd.f32 %v244, %v265
        %v283 = vadd.f32 %v245, %v265
        %v284 = vadd.f32 %v246, %v265
        %v285 = vadd.f32 %v247, %v265
        %v286 = vadd.f32 %v248, %v265
        %v287 = vadd.f32 %v249, %v265
        %v288 = vadd.f32 %v250, %v265
        %v289 = vadd.f32 %v251, %v265
        %v290 = vadd.f32 %v252, %v265
        %v291 = vadd.f32 %v253, %v265
        %v292 = vadd.f32 %v254, %v265
        %v293 = vadd.f32 %v255, %v265
        %v294 = vadd.f32 %v256, %v265
        %v295 = vadd.f32 %v257, %v265
        %v296 = vadd.f32 %v258, %v265
        %v297 = vadd.f32 %v259, %v265
        %v298 = vadd.f32 %v260, %v265
        %v299 = vld [vmem:[%s217] sm:$0xff]
        %v300 = vld [vmem:[%s217 + $0x8] sm:$0xff]
        %v301 = vld [vmem:[%s217 + $0x18] sm:$0xff]
        %v302 = vld [vmem:[%s217 + $0x20] sm:$0xff]
        %v303 = vld [vmem:[%s217 + $0x30] sm:$0xff]
        %v304 = vld [vmem:[%s217 + $0x38] sm:$0xff]
        %v305 = vld [vmem:[%s217 + $0x48] sm:$0xff]
        %v306 = vld [vmem:[%s217 + $0x50] sm:$0xff]
        %v307 = vld [vmem:[%s217 + $0x60] sm:$0xff]
        %v308 = vld [vmem:[%s217 + $0x68] sm:$0xff]
        %v309 = vld [vmem:[%s217 + $0x78] sm:$0xff]
        %v310 = vld [vmem:[%s217 + $0x80] sm:$0xff]
        %v311 = vld [vmem:[%s217 + $0x90] sm:$0xff]
        %v312 = vld [vmem:[%s217 + $0x98] sm:$0xff]
        %v313 = vld [vmem:[%s217 + $0xa8] sm:$0xff]
        %v314 = vld [vmem:[%s217 + $0xb0] sm:$0xff]
        %v315 = vld [vmem:[%s217 + $0xc0] sm:$0xff]
        %v316 = vld [vmem:[%s217 + $0xc8] sm:$0xff]
        %v317 = vld [vmem:[%s217 + $0xd8] sm:$0xff]
        %v318 = vld [vmem:[%s217 + $0xe0] sm:$0xff]
        %v319 = vld [vmem:[%s217 + $0xf0] sm:$0xff]
        %v320 = vld [vmem:[%s217 + $0xf8] sm:$0xff]
        %v321 = vld [vmem:[%s217 + $0x108] sm:$0xff]
        %v322 = vld [vmem:[%s217 + $0x110] sm:$0xff]
        %v323 = vld [vmem:[%s217 + $0x120] sm:$0xff]
        %v324 = vld [vmem:[%s217 + $0x128] sm:$0xff]
        %v325 = vld [vmem:[%s217 + $0x138] sm:$0xff]
        %v326 = vld [vmem:[%s217 + $0x140] sm:$0xff]
        %v327 = vld [vmem:[%s217 + $0x150] sm:$0xff]
        %v328 = vld [vmem:[%s217 + $0x158] sm:$0xff]
        %v329 = vld [vmem:[%s217 + $0x168] sm:$0xff]
        %v330 = vld [vmem:[%s217 + $0x170] sm:$0xff]
        %v331 = vlaneseq
        %v332 = vshrl.u32 %v331, 7
        %v333 = vsub.s32 0, %v332
        %v334 = vrot.slane %v225, %v333
        %v335 = vmul.f32 %v299, %v334
        %v336 = vmul.f32 %v300, %v334
        %v337 = vmul.f32 %v301, %v334
        %v338 = vmul.f32 %v302, %v334
        %v339 = vmul.f32 %v303, %v334
        %v340 = vmul.f32 %v304, %v334
        %v341 = vmul.f32 %v305, %v334
        %v342 = vmul.f32 %v306, %v334
        %v343 = vmul.f32 %v307, %v334
        %v344 = vmul.f32 %v308, %v334
        %v345 = vmul.f32 %v309, %v334
        %v346 = vmul.f32 %v310, %v334
        %v347 = vmul.f32 %v311, %v334
        %v348 = vmul.f32 %v312, %v334
        %v349 = vmul.f32 %v313, %v334
        %v350 = vmul.f32 %v314, %v334
        %v351 = vmul.f32 %v315, %v334
        %v352 = vmul.f32 %v316, %v334
        %v353 = vmul.f32 %v317, %v334
        %v354 = vmul.f32 %v318, %v334
        %v355 = vmul.f32 %v319, %v334
        %v356 = vmul.f32 %v320, %v334
        %v357 = vmul.f32 %v321, %v334
        %v358 = vmul.f32 %v322, %v334
        %v359 = vmul.f32 %v323, %v334
        %v360 = vmul.f32 %v324, %v334
        %v361 = vmul.f32 %v325, %v334
        %v362 = vmul.f32 %v326, %v334
        %v363 = vmul.f32 %v327, %v334
        %v364 = vmul.f32 %v328, %v334
        %v365 = vmul.f32 %v329, %v334
        %v366 = vmul.f32 %v330, %v334
        %v367 = vadd.f32 %v267, %v335
        %v368 = vadd.f32 %v268, %v336
        %v369 = vadd.f32 %v269, %v337
        %v370 = vadd.f32 %v270, %v338
        %v371 = vadd.f32 %v271, %v339
        %v372 = vadd.f32 %v272, %v340
        %v373 = vadd.f32 %v273, %v341
        %v374 = vadd.f32 %v274, %v342
        %v375 = vadd.f32 %v275, %v343
        %v376 = vadd.f32 %v276, %v344
        %v377 = vadd.f32 %v277, %v345
        %v378 = vadd.f32 %v278, %v346
        %v379 = vadd.f32 %v279, %v347
        %v380 = vadd.f32 %v280, %v348
        %v381 = vadd.f32 %v281, %v349
        %v382 = vadd.f32 %v282, %v350
        %v383 = vadd.f32 %v283, %v351
        %v384 = vadd.f32 %v284, %v352
        %v385 = vadd.f32 %v285, %v353
        %v386 = vadd.f32 %v286, %v354
        %v387 = vadd.f32 %v287, %v355
        %v388 = vadd.f32 %v288, %v356
        %v389 = vadd.f32 %v289, %v357
        %v390 = vadd.f32 %v290, %v358
        %v391 = vadd.f32 %v291, %v359
        %v392 = vadd.f32 %v292, %v360
        %v393 = vadd.f32 %v293, %v361
        %v394 = vadd.f32 %v294, %v362
        %v395 = vadd.f32 %v295, %v363
        %v396 = vadd.f32 %v296, %v364
        %v397 = vadd.f32 %v297, %v365
        %v398 = vadd.f32 %v298, %v366
        %v399 = vld [vmem:[%s217 + $0x1] sm:$0xff]
        %v400 = vld [vmem:[%s217 + $0x9] sm:$0xff]
        %v401 = vld [vmem:[%s217 + $0x19] sm:$0xff]
        %v402 = vld [vmem:[%s217 + $0x21] sm:$0xff]
        %v403 = vld [vmem:[%s217 + $0x31] sm:$0xff]
        %v404 = vld [vmem:[%s217 + $0x39] sm:$0xff]
        %v405 = vld [vmem:[%s217 + $0x49] sm:$0xff]
        %v406 = vld [vmem:[%s217 + $0x51] sm:$0xff]
        %v407 = vld [vmem:[%s217 + $0x61] sm:$0xff]
        %v408 = vld [vmem:[%s217 + $0x69] sm:$0xff]
        %v409 = vld [vmem:[%s217 + $0x79] sm:$0xff]
        %v410 = vld [vmem:[%s217 + $0x81] sm:$0xff]
        %v411 = vld [vmem:[%s217 + $0x91] sm:$0xff]
        %v412 = vld [vmem:[%s217 + $0x99] sm:$0xff]
        %v413 = vld [vmem:[%s217 + $0xa9] sm:$0xff]
        %v414 = vld [vmem:[%s217 + $0xb1] sm:$0xff]
        %v415 = vld [vmem:[%s217 + $0xc1] sm:$0xff]
        %v416 = vld [vmem:[%s217 + $0xc9] sm:$0xff]
        %v417 = vld [vmem:[%s217 + $0xd9] sm:$0xff]
        %v418 = vld [vmem:[%s217 + $0xe1] sm:$0xff]
        %v419 = vld [vmem:[%s217 + $0xf1] sm:$0xff]
        %v420 = vld [vmem:[%s217 + $0xf9] sm:$0xff]
        %v421 = vld [vmem:[%s217 + $0x109] sm:$0xff]
        %v422 = vld [vmem:[%s217 + $0x111] sm:$0xff]
        %v423 = vld [vmem:[%s217 + $0x121] sm:$0xff]
        %v424 = vld [vmem:[%s217 + $0x129] sm:$0xff]
        %v425 = vld [vmem:[%s217 + $0x139] sm:$0xff]
        %v426 = vld [vmem:[%s217 + $0x141] sm:$0xff]
        %v427 = vld [vmem:[%s217 + $0x151] sm:$0xff]
        %v428 = vld [vmem:[%s217 + $0x159] sm:$0xff]
        %v429 = vld [vmem:[%s217 + $0x169] sm:$0xff]
        %v430 = vld [vmem:[%s217 + $0x171] sm:$0xff]
        %v431 = vlaneseq
        %v432 = vshrl.u32 %v431, 7
        %v433 = vsub.s32 1, %v432
        %v434 = vrot.slane %v225, %v433
        %v435 = vmul.f32 %v399, %v434
        %v436 = vmul.f32 %v400, %v434
        %v437 = vmul.f32 %v401, %v434
        %v438 = vmul.f32 %v402, %v434
        %v439 = vmul.f32 %v403, %v434
        %v440 = vmul.f32 %v404, %v434
        %v441 = vmul.f32 %v405, %v434
        %v442 = vmul.f32 %v406, %v434
        %v443 = vmul.f32 %v407, %v434
        %v444 = vmul.f32 %v408, %v434
        %v445 = vmul.f32 %v409, %v434
        %v446 = vmul.f32 %v410, %v434
        %v447 = vmul.f32 %v411, %v434
        %v448 = vmul.f32 %v412, %v434
        %v449 = vmul.f32 %v413, %v434
        %v450 = vmul.f32 %v414, %v434
        %v451 = vmul.f32 %v415, %v434
        %v452 = vmul.f32 %v416, %v434
        %v453 = vmul.f32 %v417, %v434
        %v454 = vmul.f32 %v418, %v434
        %v455 = vmul.f32 %v419, %v434
        %v456 = vmul.f32 %v420, %v434
        %v457 = vmul.f32 %v421, %v434
        %v458 = vmul.f32 %v422, %v434
        %v459 = vmul.f32 %v423, %v434
        %v460 = vmul.f32 %v424, %v434
        %v461 = vmul.f32 %v425, %v434
        %v462 = vmul.f32 %v426, %v434
        %v463 = vmul.f32 %v427, %v434
        %v464 = vmul.f32 %v428, %v434
        %v465 = vmul.f32 %v429, %v434
        %v466 = vmul.f32 %v430, %v434
        %v467 = vadd.f32 %v367, %v435
        %v468 = vadd.f32 %v368, %v436
        %v469 = vadd.f32 %v369, %v437
        %v470 = vadd.f32 %v370, %v438
        %v471 = vadd.f32 %v371, %v439
        %v472 = vadd.f32 %v372, %v440
        %v473 = vadd.f32 %v373, %v441
        %v474 = vadd.f32 %v374, %v442
        %v475 = vadd.f32 %v375, %v443
        %v476 = vadd.f32 %v376, %v444
        %v477 = vadd.f32 %v377, %v445
        %v478 = vadd.f32 %v378, %v446
        %v479 = vadd.f32 %v379, %v447
        %v480 = vadd.f32 %v380, %v448
        %v481 = vadd.f32 %v381, %v449
        %v482 = vadd.f32 %v382, %v450
        %v483 = vadd.f32 %v383, %v451
        %v484 = vadd.f32 %v384, %v452
        %v485 = vadd.f32 %v385, %v453
        %v486 = vadd.f32 %v386, %v454
        %v487 = vadd.f32 %v387, %v455
        %v488 = vadd.f32 %v388, %v456
        %v489 = vadd.f32 %v389, %v457
        %v490 = vadd.f32 %v390, %v458
        %v491 = vadd.f32 %v391, %v459
        %v492 = vadd.f32 %v392, %v460
        %v493 = vadd.f32 %v393, %v461
        %v494 = vadd.f32 %v394, %v462
        %v495 = vadd.f32 %v395, %v463
        %v496 = vadd.f32 %v396, %v464
        %v497 = vadd.f32 %v397, %v465
        %v498 = vadd.f32 %v398, %v466
        %v499 = vld [vmem:[%s217 + $0x2] sm:$0xff]
        %v500 = vld [vmem:[%s217 + $0xa] sm:$0xff]
        %v501 = vld [vmem:[%s217 + $0x1a] sm:$0xff]
        %v502 = vld [vmem:[%s217 + $0x22] sm:$0xff]
        %v503 = vld [vmem:[%s217 + $0x32] sm:$0xff]
        %v504 = vld [vmem:[%s217 + $0x3a] sm:$0xff]
        %v505 = vld [vmem:[%s217 + $0x4a] sm:$0xff]
        %v506 = vld [vmem:[%s217 + $0x52] sm:$0xff]
        %v507 = vld [vmem:[%s217 + $0x62] sm:$0xff]
        %v508 = vld [vmem:[%s217 + $0x6a] sm:$0xff]
        %v509 = vld [vmem:[%s217 + $0x7a] sm:$0xff]
        %v510 = vld [vmem:[%s217 + $0x82] sm:$0xff]
        %v511 = vld [vmem:[%s217 + $0x92] sm:$0xff]
        %v512 = vld [vmem:[%s217 + $0x9a] sm:$0xff]
        %v513 = vld [vmem:[%s217 + $0xaa] sm:$0xff]
        %v514 = vld [vmem:[%s217 + $0xb2] sm:$0xff]
        %v515 = vld [vmem:[%s217 + $0xc2] sm:$0xff]
        %v516 = vld [vmem:[%s217 + $0xca] sm:$0xff]
        %v517 = vld [vmem:[%s217 + $0xda] sm:$0xff]
        %v518 = vld [vmem:[%s217 + $0xe2] sm:$0xff]
        %v519 = vld [vmem:[%s217 + $0xf2] sm:$0xff]
        %v520 = vld [vmem:[%s217 + $0xfa] sm:$0xff]
        %v521 = vld [vmem:[%s217 + $0x10a] sm:$0xff]
        %v522 = vld [vmem:[%s217 + $0x112] sm:$0xff]
        %v523 = vld [vmem:[%s217 + $0x122] sm:$0xff]
        %v524 = vld [vmem:[%s217 + $0x12a] sm:$0xff]
        %v525 = vld [vmem:[%s217 + $0x13a] sm:$0xff]
        %v526 = vld [vmem:[%s217 + $0x142] sm:$0xff]
        %v527 = vld [vmem:[%s217 + $0x152] sm:$0xff]
        %v528 = vld [vmem:[%s217 + $0x15a] sm:$0xff]
        %v529 = vld [vmem:[%s217 + $0x16a] sm:$0xff]
        %v530 = vld [vmem:[%s217 + $0x172] sm:$0xff]
        %v531 = vlaneseq
        %v532 = vshrl.u32 %v531, 7
        %v533 = vsub.s32 2, %v532
        %v534 = vrot.slane %v225, %v533
        %v535 = vmul.f32 %v499, %v534
        %v536 = vmul.f32 %v500, %v534
        %v537 = vmul.f32 %v501, %v534
        %v538 = vmul.f32 %v502, %v534
        %v539 = vmul.f32 %v503, %v534
        %v540 = vmul.f32 %v504, %v534
        %v541 = vmul.f32 %v505, %v534
        %v542 = vmul.f32 %v506, %v534
        %v543 = vmul.f32 %v507, %v534
        %v544 = vmul.f32 %v508, %v534
        %v545 = vmul.f32 %v509, %v534
        %v546 = vmul.f32 %v510, %v534
        %v547 = vmul.f32 %v511, %v534
        %v548 = vmul.f32 %v512, %v534
        %v549 = vmul.f32 %v513, %v534
        %v550 = vmul.f32 %v514, %v534
        %v551 = vmul.f32 %v515, %v534
        %v552 = vmul.f32 %v516, %v534
        %v553 = vmul.f32 %v517, %v534
        %v554 = vmul.f32 %v518, %v534
        %v555 = vmul.f32 %v519, %v534
        %v556 = vmul.f32 %v520, %v534
        %v557 = vmul.f32 %v521, %v534
        %v558 = vmul.f32 %v522, %v534
        %v559 = vmul.f32 %v523, %v534
        %v560 = vmul.f32 %v524, %v534
        %v561 = vmul.f32 %v525, %v534
        %v562 = vmul.f32 %v526, %v534
        %v563 = vmul.f32 %v527, %v534
        %v564 = vmul.f32 %v528, %v534
        %v565 = vmul.f32 %v529, %v534
        %v566 = vmul.f32 %v530, %v534
        %v567 = vadd.f32 %v467, %v535
        %v568 = vadd.f32 %v468, %v536
        %v569 = vadd.f32 %v469, %v537
        %v570 = vadd.f32 %v470, %v538
        %v571 = vadd.f32 %v471, %v539
        %v572 = vadd.f32 %v472, %v540
        %v573 = vadd.f32 %v473, %v541
        %v574 = vadd.f32 %v474, %v542
        %v575 = vadd.f32 %v475, %v543
        %v576 = vadd.f32 %v476, %v544
        %v577 = vadd.f32 %v477, %v545
        %v578 = vadd.f32 %v478, %v546
        %v579 = vadd.f32 %v479, %v547
        %v580 = vadd.f32 %v480, %v548
        %v581 = vadd.f32 %v481, %v549
        %v582 = vadd.f32 %v482, %v550
        %v583 = vadd.f32 %v483, %v551
        %v584 = vadd.f32 %v484, %v552
        %v585 = vadd.f32 %v485, %v553
        %v586 = vadd.f32 %v486, %v554
        %v587 = vadd.f32 %v487, %v555
        %v588 = vadd.f32 %v488, %v556
        %v589 = vadd.f32 %v489, %v557
        %v590 = vadd.f32 %v490, %v558
        %v591 = vadd.f32 %v491, %v559
        %v592 = vadd.f32 %v492, %v560
        %v593 = vadd.f32 %v493, %v561
        %v594 = vadd.f32 %v494, %v562
        %v595 = vadd.f32 %v495, %v563
        %v596 = vadd.f32 %v496, %v564
        %v597 = vadd.f32 %v497, %v565
        %v598 = vadd.f32 %v498, %v566
        %v599 = vld [vmem:[%s228] sm:$0xff]
        %v600 = vld [vmem:[%s228 + $0x8] sm:$0xff]
        %v601 = vld [vmem:[%s228 + $0x18] sm:$0xff]
        %v602 = vld [vmem:[%s228 + $0x20] sm:$0xff]
        %v603 = vld [vmem:[%s228 + $0x30] sm:$0xff]
        %v604 = vld [vmem:[%s228 + $0x38] sm:$0xff]
        %v605 = vld [vmem:[%s228 + $0x48] sm:$0xff]
        %v606 = vld [vmem:[%s228 + $0x50] sm:$0xff]
        %v607 = vld [vmem:[%s228 + $0x60] sm:$0xff]
        %v608 = vld [vmem:[%s228 + $0x68] sm:$0xff]
        %v609 = vld [vmem:[%s228 + $0x78] sm:$0xff]
        %v610 = vld [vmem:[%s228 + $0x80] sm:$0xff]
        %v611 = vld [vmem:[%s228 + $0x90] sm:$0xff]
        %v612 = vld [vmem:[%s228 + $0x98] sm:$0xff]
        %v613 = vld [vmem:[%s228 + $0xa8] sm:$0xff]
        %v614 = vld [vmem:[%s228 + $0xb0] sm:$0xff]
        %v615 = vld [vmem:[%s228 + $0xc0] sm:$0xff]
        %v616 = vld [vmem:[%s228 + $0xc8] sm:$0xff]
        %v617 = vld [vmem:[%s228 + $0xd8] sm:$0xff]
        %v618 = vld [vmem:[%s228 + $0xe0] sm:$0xff]
        %v619 = vld [vmem:[%s228 + $0xf0] sm:$0xff]
        %v620 = vld [vmem:[%s228 + $0xf8] sm:$0xff]
        %v621 = vld [vmem:[%s228 + $0x108] sm:$0xff]
        %v622 = vld [vmem:[%s228 + $0x110] sm:$0xff]
        %v623 = vld [vmem:[%s228 + $0x120] sm:$0xff]
        %v624 = vld [vmem:[%s228 + $0x128] sm:$0xff]
        %v625 = vld [vmem:[%s228 + $0x138] sm:$0xff]
        %v626 = vld [vmem:[%s228 + $0x140] sm:$0xff]
        %v627 = vld [vmem:[%s228 + $0x150] sm:$0xff]
        %v628 = vld [vmem:[%s228 + $0x158] sm:$0xff]
        %v629 = vld [vmem:[%s228 + $0x168] sm:$0xff]
        %v630 = vld [vmem:[%s228 + $0x170] sm:$0xff]
        %v631 = vlaneseq
        %v632 = vshrl.u32 %v631, 7
        %v633 = vsub.s32 3, %v632
        %v634 = vrot.slane %v225, %v633
        %v635 = vmul.f32 %v599, %v634
        %v636 = vmul.f32 %v600, %v634
        %v637 = vmul.f32 %v601, %v634
        %v638 = vmul.f32 %v602, %v634
        %v639 = vmul.f32 %v603, %v634
        %v640 = vmul.f32 %v604, %v634
        %v641 = vmul.f32 %v605, %v634
        %v642 = vmul.f32 %v606, %v634
        %v643 = vmul.f32 %v607, %v634
        %v644 = vmul.f32 %v608, %v634
        %v645 = vmul.f32 %v609, %v634
        %v646 = vmul.f32 %v610, %v634
        %v647 = vmul.f32 %v611, %v634
        %v648 = vmul.f32 %v612, %v634
        %v649 = vmul.f32 %v613, %v634
        %v650 = vmul.f32 %v614, %v634
        %v651 = vmul.f32 %v615, %v634
        %v652 = vmul.f32 %v616, %v634
        %v653 = vmul.f32 %v617, %v634
        %v654 = vmul.f32 %v618, %v634
        %v655 = vmul.f32 %v619, %v634
        %v656 = vmul.f32 %v620, %v634
        %v657 = vmul.f32 %v621, %v634
        %v658 = vmul.f32 %v622, %v634
        %v659 = vmul.f32 %v623, %v634
        %v660 = vmul.f32 %v624, %v634
        %v661 = vmul.f32 %v625, %v634
        %v662 = vmul.f32 %v626, %v634
        %v663 = vmul.f32 %v627, %v634
        %v664 = vmul.f32 %v628, %v634
        %v665 = vmul.f32 %v629, %v634
        %v666 = vmul.f32 %v630, %v634
        %v667 = vadd.f32 %v567, %v635
        %v668 = vadd.f32 %v568, %v636
        %v669 = vadd.f32 %v569, %v637
        %v670 = vadd.f32 %v570, %v638
        %v671 = vadd.f32 %v571, %v639
        %v672 = vadd.f32 %v572, %v640
        %v673 = vadd.f32 %v573, %v641
        %v674 = vadd.f32 %v574, %v642
        %v675 = vadd.f32 %v575, %v643
        %v676 = vadd.f32 %v576, %v644
        %v677 = vadd.f32 %v577, %v645
        %v678 = vadd.f32 %v578, %v646
        %v679 = vadd.f32 %v579, %v647
        %v680 = vadd.f32 %v580, %v648
        %v681 = vadd.f32 %v581, %v649
        %v682 = vadd.f32 %v582, %v650
        %v683 = vadd.f32 %v583, %v651
        %v684 = vadd.f32 %v584, %v652
        %v685 = vadd.f32 %v585, %v653
        %v686 = vadd.f32 %v586, %v654
        %v687 = vadd.f32 %v587, %v655
        %v688 = vadd.f32 %v588, %v656
        %v689 = vadd.f32 %v589, %v657
        %v690 = vadd.f32 %v590, %v658
        %v691 = vadd.f32 %v591, %v659
        %v692 = vadd.f32 %v592, %v660
        %v693 = vadd.f32 %v593, %v661
        %v694 = vadd.f32 %v594, %v662
        %v695 = vadd.f32 %v595, %v663
        %v696 = vadd.f32 %v596, %v664
        %v697 = vadd.f32 %v597, %v665
        %v698 = vadd.f32 %v598, %v666
        %v699 = vlaneseq
        %v700 = vshrl.u32 %v699, 7
        %v701 = vsub.s32 4, %v700
        %v702 = vrot.slane %v225, %v701
        %v703 = vmul.f32 %v229, %v702
        %v704 = vmul.f32 %v230, %v702
        %v705 = vmul.f32 %v231, %v702
        %v706 = vmul.f32 %v232, %v702
        %v707 = vmul.f32 %v233, %v702
        %v708 = vmul.f32 %v234, %v702
        %v709 = vmul.f32 %v235, %v702
        %v710 = vmul.f32 %v236, %v702
        %v711 = vmul.f32 %v237, %v702
        %v712 = vmul.f32 %v238, %v702
        %v713 = vmul.f32 %v239, %v702
        %v714 = vmul.f32 %v240, %v702
        %v715 = vmul.f32 %v241, %v702
        %v716 = vmul.f32 %v242, %v702
        %v717 = vmul.f32 %v243, %v702
        %v718 = vmul.f32 %v244, %v702
        %v719 = vmul.f32 %v245, %v702
        %v720 = vmul.f32 %v246, %v702
        %v721 = vmul.f32 %v247, %v702
        %v722 = vmul.f32 %v248, %v702
        %v723 = vmul.f32 %v249, %v702
        %v724 = vmul.f32 %v250, %v702
        %v725 = vmul.f32 %v251, %v702
        %v726 = vmul.f32 %v252, %v702
        %v727 = vmul.f32 %v253, %v702
        %v728 = vmul.f32 %v254, %v702
        %v729 = vmul.f32 %v255, %v702
        %v730 = vmul.f32 %v256, %v702
        %v731 = vmul.f32 %v257, %v702
        %v732 = vmul.f32 %v258, %v702
        %v733 = vmul.f32 %v259, %v702
        %v734 = vmul.f32 %v260, %v702
        %v735 = vadd.f32 %v667, %v703
        %v736 = vadd.f32 %v668, %v704
        %v737 = vadd.f32 %v669, %v705
        %v738 = vadd.f32 %v670, %v706
        %v739 = vadd.f32 %v671, %v707
        %v740 = vadd.f32 %v672, %v708
        %v741 = vadd.f32 %v673, %v709
        %v742 = vadd.f32 %v674, %v710
        %v743 = vadd.f32 %v675, %v711
        %v744 = vadd.f32 %v676, %v712
        %v745 = vadd.f32 %v677, %v713
        %v746 = vadd.f32 %v678, %v714
        %v747 = vadd.f32 %v679, %v715
        %v748 = vadd.f32 %v680, %v716
        %v749 = vadd.f32 %v681, %v717
        %v750 = vadd.f32 %v682, %v718
        %v751 = vadd.f32 %v683, %v719
        %v752 = vadd.f32 %v684, %v720
        %v753 = vadd.f32 %v685, %v721
        %v754 = vadd.f32 %v686, %v722
        %v755 = vadd.f32 %v687, %v723
        %v756 = vadd.f32 %v688, %v724
        %v757 = vadd.f32 %v689, %v725
        %v758 = vadd.f32 %v690, %v726
        %v759 = vadd.f32 %v691, %v727
        %v760 = vadd.f32 %v692, %v728
        %v761 = vadd.f32 %v693, %v729
        %v762 = vadd.f32 %v694, %v730
        %v763 = vadd.f32 %v695, %v731
        %v764 = vadd.f32 %v696, %v732
        %v765 = vadd.f32 %v697, %v733
        %v766 = vadd.f32 %v698, %v734
        %v767 = vld [vmem:[%s228 + $0x2] sm:$0xff]
        %v768 = vld [vmem:[%s228 + $0xa] sm:$0xff]
        %v769 = vld [vmem:[%s228 + $0x1a] sm:$0xff]
        %v770 = vld [vmem:[%s228 + $0x22] sm:$0xff]
        %v771 = vld [vmem:[%s228 + $0x32] sm:$0xff]
        %v772 = vld [vmem:[%s228 + $0x3a] sm:$0xff]
        %v773 = vld [vmem:[%s228 + $0x4a] sm:$0xff]
        %v774 = vld [vmem:[%s228 + $0x52] sm:$0xff]
        %v775 = vld [vmem:[%s228 + $0x62] sm:$0xff]
        %v776 = vld [vmem:[%s228 + $0x6a] sm:$0xff]
        %v777 = vld [vmem:[%s228 + $0x7a] sm:$0xff]
        %v778 = vld [vmem:[%s228 + $0x82] sm:$0xff]
        %v779 = vld [vmem:[%s228 + $0x92] sm:$0xff]
        %v780 = vld [vmem:[%s228 + $0x9a] sm:$0xff]
        %v781 = vld [vmem:[%s228 + $0xaa] sm:$0xff]
        %v782 = vld [vmem:[%s228 + $0xb2] sm:$0xff]
        %v783 = vld [vmem:[%s228 + $0xc2] sm:$0xff]
        %v784 = vld [vmem:[%s228 + $0xca] sm:$0xff]
        %v785 = vld [vmem:[%s228 + $0xda] sm:$0xff]
        %v786 = vld [vmem:[%s228 + $0xe2] sm:$0xff]
        %v787 = vld [vmem:[%s228 + $0xf2] sm:$0xff]
        %v788 = vld [vmem:[%s228 + $0xfa] sm:$0xff]
        %v789 = vld [vmem:[%s228 + $0x10a] sm:$0xff]
        %v790 = vld [vmem:[%s228 + $0x112] sm:$0xff]
        %v791 = vld [vmem:[%s228 + $0x122] sm:$0xff]
        %v792 = vld [vmem:[%s228 + $0x12a] sm:$0xff]
        %v793 = vld [vmem:[%s228 + $0x13a] sm:$0xff]
        %v794 = vld [vmem:[%s228 + $0x142] sm:$0xff]
        %v795 = vld [vmem:[%s228 + $0x152] sm:$0xff]
        %v796 = vld [vmem:[%s228 + $0x15a] sm:$0xff]
        %v797 = vld [vmem:[%s228 + $0x16a] sm:$0xff]
        %v798 = vld [vmem:[%s228 + $0x172] sm:$0xff]
        %v799 = vlaneseq
        %v800 = vshrl.u32 %v799, 7
        %v801 = vsub.s32 5, %v800
        %v802 = vrot.slane %v225, %v801
        %v803 = vmul.f32 %v767, %v802
        %v804 = vmul.f32 %v768, %v802
        %v805 = vmul.f32 %v769, %v802
        %v806 = vmul.f32 %v770, %v802
        %v807 = vmul.f32 %v771, %v802
        %v808 = vmul.f32 %v772, %v802
        %v809 = vmul.f32 %v773, %v802
        %v810 = vmul.f32 %v774, %v802
        %v811 = vmul.f32 %v775, %v802
        %v812 = vmul.f32 %v776, %v802
        %v813 = vmul.f32 %v777, %v802
        %v814 = vmul.f32 %v778, %v802
        %v815 = vmul.f32 %v779, %v802
        %v816 = vmul.f32 %v780, %v802
        %v817 = vmul.f32 %v781, %v802
        %v818 = vmul.f32 %v782, %v802
        %v819 = vmul.f32 %v783, %v802
        %v820 = vmul.f32 %v784, %v802
        %v821 = vmul.f32 %v785, %v802
        %v822 = vmul.f32 %v786, %v802
        %v823 = vmul.f32 %v787, %v802
        %v824 = vmul.f32 %v788, %v802
        %v825 = vmul.f32 %v789, %v802
        %v826 = vmul.f32 %v790, %v802
        %v827 = vmul.f32 %v791, %v802
        %v828 = vmul.f32 %v792, %v802
        %v829 = vmul.f32 %v793, %v802
        %v830 = vmul.f32 %v794, %v802
        %v831 = vmul.f32 %v795, %v802
        %v832 = vmul.f32 %v796, %v802
        %v833 = vmul.f32 %v797, %v802
        %v834 = vmul.f32 %v798, %v802
        %v835 = vadd.f32 %v735, %v803
        %v836 = vadd.f32 %v736, %v804
        %v837 = vadd.f32 %v737, %v805
        %v838 = vadd.f32 %v738, %v806
        %v839 = vadd.f32 %v739, %v807
        %v840 = vadd.f32 %v740, %v808
        %v841 = vadd.f32 %v741, %v809
        %v842 = vadd.f32 %v742, %v810
        %v843 = vadd.f32 %v743, %v811
        %v844 = vadd.f32 %v744, %v812
        %v845 = vadd.f32 %v745, %v813
        %v846 = vadd.f32 %v746, %v814
        %v847 = vadd.f32 %v747, %v815
        %v848 = vadd.f32 %v748, %v816
        %v849 = vadd.f32 %v749, %v817
        %v850 = vadd.f32 %v750, %v818
        %v851 = vadd.f32 %v751, %v819
        %v852 = vadd.f32 %v752, %v820
        %v853 = vadd.f32 %v753, %v821
        %v854 = vadd.f32 %v754, %v822
        %v855 = vadd.f32 %v755, %v823
        %v856 = vadd.f32 %v756, %v824
        %v857 = vadd.f32 %v757, %v825
        %v858 = vadd.f32 %v758, %v826
        %v859 = vadd.f32 %v759, %v827
        %v860 = vadd.f32 %v760, %v828
        %v861 = vadd.f32 %v761, %v829
        %v862 = vadd.f32 %v762, %v830
        %v863 = vadd.f32 %v763, %v831
        %v864 = vadd.f32 %v764, %v832
        %v865 = vadd.f32 %v765, %v833
        %v866 = vadd.f32 %v766, %v834
        %s867 = scalar_lea.vmem %s217, 48
        %v868 = vld [vmem:[%s867] sm:$0xff]
        %v869 = vld [vmem:[%s867 + $0x8] sm:$0xff]
        %v870 = vld [vmem:[%s867 + $0x18] sm:$0xff]
        %v871 = vld [vmem:[%s867 + $0x20] sm:$0xff]
        %v872 = vld [vmem:[%s867 + $0x30] sm:$0xff]
        %v873 = vld [vmem:[%s867 + $0x38] sm:$0xff]
        %v874 = vld [vmem:[%s867 + $0x48] sm:$0xff]
        %v875 = vld [vmem:[%s867 + $0x50] sm:$0xff]
        %v876 = vld [vmem:[%s867 + $0x60] sm:$0xff]
        %v877 = vld [vmem:[%s867 + $0x68] sm:$0xff]
        %v878 = vld [vmem:[%s867 + $0x78] sm:$0xff]
        %v879 = vld [vmem:[%s867 + $0x80] sm:$0xff]
        %v880 = vld [vmem:[%s867 + $0x90] sm:$0xff]
        %v881 = vld [vmem:[%s867 + $0x98] sm:$0xff]
        %v882 = vld [vmem:[%s867 + $0xa8] sm:$0xff]
        %v883 = vld [vmem:[%s867 + $0xb0] sm:$0xff]
        %v884 = vld [vmem:[%s867 + $0xc0] sm:$0xff]
        %v885 = vld [vmem:[%s867 + $0xc8] sm:$0xff]
        %v886 = vld [vmem:[%s867 + $0xd8] sm:$0xff]
        %v887 = vld [vmem:[%s867 + $0xe0] sm:$0xff]
        %v888 = vld [vmem:[%s867 + $0xf0] sm:$0xff]
        %v889 = vld [vmem:[%s867 + $0xf8] sm:$0xff]
        %v890 = vld [vmem:[%s867 + $0x108] sm:$0xff]
        %v891 = vld [vmem:[%s867 + $0x110] sm:$0xff]
        %v892 = vld [vmem:[%s867 + $0x120] sm:$0xff]
        %v893 = vld [vmem:[%s867 + $0x128] sm:$0xff]
        %v894 = vld [vmem:[%s867 + $0x138] sm:$0xff]
        %v895 = vld [vmem:[%s867 + $0x140] sm:$0xff]
        %v896 = vld [vmem:[%s867 + $0x150] sm:$0xff]
        %v897 = vld [vmem:[%s867 + $0x158] sm:$0xff]
        %v898 = vld [vmem:[%s867 + $0x168] sm:$0xff]
        %v899 = vld [vmem:[%s867 + $0x170] sm:$0xff]
        %v900 = vlaneseq
        %v901 = vshrl.u32 %v900, 7
        %v902 = vsub.s32 6, %v901
        %v903 = vrot.slane %v225, %v902
        %v904 = vmul.f32 %v868, %v903
        %v905 = vmul.f32 %v869, %v903
        %v906 = vmul.f32 %v870, %v903
        %v907 = vmul.f32 %v871, %v903
        %v908 = vmul.f32 %v872, %v903
        %v909 = vmul.f32 %v873, %v903
        %v910 = vmul.f32 %v874, %v903
        %v911 = vmul.f32 %v875, %v903
        %v912 = vmul.f32 %v876, %v903
        %v913 = vmul.f32 %v877, %v903
        %v914 = vmul.f32 %v878, %v903
        %v915 = vmul.f32 %v879, %v903
        %v916 = vmul.f32 %v880, %v903
        %v917 = vmul.f32 %v881, %v903
        %v918 = vmul.f32 %v882, %v903
        %v919 = vmul.f32 %v883, %v903
        %v920 = vmul.f32 %v884, %v903
        %v921 = vmul.f32 %v885, %v903
        %v922 = vmul.f32 %v886, %v903
        %v923 = vmul.f32 %v887, %v903
        %v924 = vmul.f32 %v888, %v903
        %v925 = vmul.f32 %v889, %v903
        %v926 = vmul.f32 %v890, %v903
        %v927 = vmul.f32 %v891, %v903
        %v928 = vmul.f32 %v892, %v903
        %v929 = vmul.f32 %v893, %v903
        %v930 = vmul.f32 %v894, %v903
        %v931 = vmul.f32 %v895, %v903
        %v932 = vmul.f32 %v896, %v903
        %v933 = vmul.f32 %v897, %v903
        %v934 = vmul.f32 %v898, %v903
        %v935 = vmul.f32 %v899, %v903
        %v936 = vadd.f32 %v835, %v904
        %v937 = vadd.f32 %v836, %v905
        %v938 = vadd.f32 %v837, %v906
        %v939 = vadd.f32 %v838, %v907
        %v940 = vadd.f32 %v839, %v908
        %v941 = vadd.f32 %v840, %v909
        %v942 = vadd.f32 %v841, %v910
        %v943 = vadd.f32 %v842, %v911
        %v944 = vadd.f32 %v843, %v912
        %v945 = vadd.f32 %v844, %v913
        %v946 = vadd.f32 %v845, %v914
        %v947 = vadd.f32 %v846, %v915
        %v948 = vadd.f32 %v847, %v916
        %v949 = vadd.f32 %v848, %v917
        %v950 = vadd.f32 %v849, %v918
        %v951 = vadd.f32 %v850, %v919
        %v952 = vadd.f32 %v851, %v920
        %v953 = vadd.f32 %v852, %v921
        %v954 = vadd.f32 %v853, %v922
        %v955 = vadd.f32 %v854, %v923
        %v956 = vadd.f32 %v855, %v924
        %v957 = vadd.f32 %v856, %v925
        %v958 = vadd.f32 %v857, %v926
        %v959 = vadd.f32 %v858, %v927
        %v960 = vadd.f32 %v859, %v928
        %v961 = vadd.f32 %v860, %v929
        %v962 = vadd.f32 %v861, %v930
        %v963 = vadd.f32 %v862, %v931
        %v964 = vadd.f32 %v863, %v932
        %v965 = vadd.f32 %v864, %v933
        %v966 = vadd.f32 %v865, %v934
        %v967 = vadd.f32 %v866, %v935
        %v968 = vld [vmem:[%s867 + $0x1] sm:$0xff]
        %v969 = vld [vmem:[%s867 + $0x9] sm:$0xff]
        %v970 = vld [vmem:[%s867 + $0x19] sm:$0xff]
        %v971 = vld [vmem:[%s867 + $0x21] sm:$0xff]
        %v972 = vld [vmem:[%s867 + $0x31] sm:$0xff]
        %v973 = vld [vmem:[%s867 + $0x39] sm:$0xff]
        %v974 = vld [vmem:[%s867 + $0x49] sm:$0xff]
        %v975 = vld [vmem:[%s867 + $0x51] sm:$0xff]
        %v976 = vld [vmem:[%s867 + $0x61] sm:$0xff]
        %v977 = vld [vmem:[%s867 + $0x69] sm:$0xff]
        %v978 = vld [vmem:[%s867 + $0x79] sm:$0xff]
        %v979 = vld [vmem:[%s867 + $0x81] sm:$0xff]
        %v980 = vld [vmem:[%s867 + $0x91] sm:$0xff]
        %v981 = vld [vmem:[%s867 + $0x99] sm:$0xff]
        %v982 = vld [vmem:[%s867 + $0xa9] sm:$0xff]
        %v983 = vld [vmem:[%s867 + $0xb1] sm:$0xff]
        %v984 = vld [vmem:[%s867 + $0xc1] sm:$0xff]
        %v985 = vld [vmem:[%s867 + $0xc9] sm:$0xff]
        %v986 = vld [vmem:[%s867 + $0xd9] sm:$0xff]
        %v987 = vld [vmem:[%s867 + $0xe1] sm:$0xff]
        %v988 = vld [vmem:[%s867 + $0xf1] sm:$0xff]
        %v989 = vld [vmem:[%s867 + $0xf9] sm:$0xff]
        %v990 = vld [vmem:[%s867 + $0x109] sm:$0xff]
        %v991 = vld [vmem:[%s867 + $0x111] sm:$0xff]
        %v992 = vld [vmem:[%s867 + $0x121] sm:$0xff]
        %v993 = vld [vmem:[%s867 + $0x129] sm:$0xff]
        %v994 = vld [vmem:[%s867 + $0x139] sm:$0xff]
        %v995 = vld [vmem:[%s867 + $0x141] sm:$0xff]
        %v996 = vld [vmem:[%s867 + $0x151] sm:$0xff]
        %v997 = vld [vmem:[%s867 + $0x159] sm:$0xff]
        %v998 = vld [vmem:[%s867 + $0x169] sm:$0xff]
        %v999 = vld [vmem:[%s867 + $0x171] sm:$0xff]
        %v1000 = vlaneseq
        %v1001 = vshrl.u32 %v1000, 7
        %v1002 = vsub.s32 7, %v1001
        %v1003 = vrot.slane %v225, %v1002
        %v1004 = vmul.f32 %v968, %v1003
        %v1005 = vmul.f32 %v969, %v1003
        %v1006 = vmul.f32 %v970, %v1003
        %v1007 = vmul.f32 %v971, %v1003
        %v1008 = vmul.f32 %v972, %v1003
        %v1009 = vmul.f32 %v973, %v1003
        %v1010 = vmul.f32 %v974, %v1003
        %v1011 = vmul.f32 %v975, %v1003
        %v1012 = vmul.f32 %v976, %v1003
        %v1013 = vmul.f32 %v977, %v1003
        %v1014 = vmul.f32 %v978, %v1003
        %v1015 = vmul.f32 %v979, %v1003
        %v1016 = vmul.f32 %v980, %v1003
        %v1017 = vmul.f32 %v981, %v1003
        %v1018 = vmul.f32 %v982, %v1003
        %v1019 = vmul.f32 %v983, %v1003
        %v1020 = vmul.f32 %v984, %v1003
        %v1021 = vmul.f32 %v985, %v1003
        %v1022 = vmul.f32 %v986, %v1003
        %v1023 = vmul.f32 %v987, %v1003
        %v1024 = vmul.f32 %v988, %v1003
        %v1025 = vmul.f32 %v989, %v1003
        %v1026 = vmul.f32 %v990, %v1003
        %v1027 = vmul.f32 %v991, %v1003
        %v1028 = vmul.f32 %v992, %v1003
        %v1029 = vmul.f32 %v993, %v1003
        %v1030 = vmul.f32 %v994, %v1003
        %v1031 = vmul.f32 %v995, %v1003
        %v1032 = vmul.f32 %v996, %v1003
        %v1033 = vmul.f32 %v997, %v1003
        %v1034 = vmul.f32 %v998, %v1003
        %v1035 = vmul.f32 %v999, %v1003
        %v1036 = vadd.f32 %v936, %v1004
        %v1037 = vadd.f32 %v937, %v1005
        %v1038 = vadd.f32 %v938, %v1006
        %v1039 = vadd.f32 %v939, %v1007
        %v1040 = vadd.f32 %v940, %v1008
        %v1041 = vadd.f32 %v941, %v1009
        %v1042 = vadd.f32 %v942, %v1010
        %v1043 = vadd.f32 %v943, %v1011
        %v1044 = vadd.f32 %v944, %v1012
        %v1045 = vadd.f32 %v945, %v1013
        %v1046 = vadd.f32 %v946, %v1014
        %v1047 = vadd.f32 %v947, %v1015
        %v1048 = vadd.f32 %v948, %v1016
        %v1049 = vadd.f32 %v949, %v1017
        %v1050 = vadd.f32 %v950, %v1018
        %v1051 = vadd.f32 %v951, %v1019
        %v1052 = vadd.f32 %v952, %v1020
        %v1053 = vadd.f32 %v953, %v1021
        %v1054 = vadd.f32 %v954, %v1022
        %v1055 = vadd.f32 %v955, %v1023
        %v1056 = vadd.f32 %v956, %v1024
        %v1057 = vadd.f32 %v957, %v1025
        %v1058 = vadd.f32 %v958, %v1026
        %v1059 = vadd.f32 %v959, %v1027
        %v1060 = vadd.f32 %v960, %v1028
        %v1061 = vadd.f32 %v961, %v1029
        %v1062 = vadd.f32 %v962, %v1030
        %v1063 = vadd.f32 %v963, %v1031
        %v1064 = vadd.f32 %v964, %v1032
        %v1065 = vadd.f32 %v965, %v1033
        %v1066 = vadd.f32 %v966, %v1034
        %v1067 = vadd.f32 %v967, %v1035
        %v1068 = vld [vmem:[%s867 + $0x2] sm:$0xff]
        %v1069 = vld [vmem:[%s867 + $0xa] sm:$0xff]
        %v1070 = vld [vmem:[%s867 + $0x1a] sm:$0xff]
        %v1071 = vld [vmem:[%s867 + $0x22] sm:$0xff]
        %v1072 = vld [vmem:[%s867 + $0x32] sm:$0xff]
        %v1073 = vld [vmem:[%s867 + $0x3a] sm:$0xff]
        %v1074 = vld [vmem:[%s867 + $0x4a] sm:$0xff]
        %v1075 = vld [vmem:[%s867 + $0x52] sm:$0xff]
        %v1076 = vld [vmem:[%s867 + $0x62] sm:$0xff]
        %v1077 = vld [vmem:[%s867 + $0x6a] sm:$0xff]
        %v1078 = vld [vmem:[%s867 + $0x7a] sm:$0xff]
        %v1079 = vld [vmem:[%s867 + $0x82] sm:$0xff]
        %v1080 = vld [vmem:[%s867 + $0x92] sm:$0xff]
        %v1081 = vld [vmem:[%s867 + $0x9a] sm:$0xff]
        %v1082 = vld [vmem:[%s867 + $0xaa] sm:$0xff]
        %v1083 = vld [vmem:[%s867 + $0xb2] sm:$0xff]
        %v1084 = vld [vmem:[%s867 + $0xc2] sm:$0xff]
        %v1085 = vld [vmem:[%s867 + $0xca] sm:$0xff]
        %v1086 = vld [vmem:[%s867 + $0xda] sm:$0xff]
        %v1087 = vld [vmem:[%s867 + $0xe2] sm:$0xff]
        %v1088 = vld [vmem:[%s867 + $0xf2] sm:$0xff]
        %v1089 = vld [vmem:[%s867 + $0xfa] sm:$0xff]
        %v1090 = vld [vmem:[%s867 + $0x10a] sm:$0xff]
        %v1091 = vld [vmem:[%s867 + $0x112] sm:$0xff]
        %v1092 = vld [vmem:[%s867 + $0x122] sm:$0xff]
        %v1093 = vld [vmem:[%s867 + $0x12a] sm:$0xff]
        %v1094 = vld [vmem:[%s867 + $0x13a] sm:$0xff]
        %v1095 = vld [vmem:[%s867 + $0x142] sm:$0xff]
        %v1096 = vld [vmem:[%s867 + $0x152] sm:$0xff]
        %v1097 = vld [vmem:[%s867 + $0x15a] sm:$0xff]
        %v1098 = vld [vmem:[%s867 + $0x16a] sm:$0xff]
        %v1099 = vld [vmem:[%s867 + $0x172] sm:$0xff]
        %v1100 = vlaneseq
        %v1101 = vshrl.u32 %v1100, 7
        %v1102 = vsub.s32 0, %v1101
        %v1103 = vrot.slane %v226, %v1102
        %v1104 = vmul.f32 %v1068, %v1103
        %v1105 = vmul.f32 %v1069, %v1103
        %v1106 = vmul.f32 %v1070, %v1103
        %v1107 = vmul.f32 %v1071, %v1103
        %v1108 = vmul.f32 %v1072, %v1103
        %v1109 = vmul.f32 %v1073, %v1103
        %v1110 = vmul.f32 %v1074, %v1103
        %v1111 = vmul.f32 %v1075, %v1103
        %v1112 = vmul.f32 %v1076, %v1103
        %v1113 = vmul.f32 %v1077, %v1103
        %v1114 = vmul.f32 %v1078, %v1103
        %v1115 = vmul.f32 %v1079, %v1103
        %v1116 = vmul.f32 %v1080, %v1103
        %v1117 = vmul.f32 %v1081, %v1103
        %v1118 = vmul.f32 %v1082, %v1103
        %v1119 = vmul.f32 %v1083, %v1103
        %v1120 = vmul.f32 %v1084, %v1103
        %v1121 = vmul.f32 %v1085, %v1103
        %v1122 = vmul.f32 %v1086, %v1103
        %v1123 = vmul.f32 %v1087, %v1103
        %v1124 = vmul.f32 %v1088, %v1103
        %v1125 = vmul.f32 %v1089, %v1103
        %v1126 = vmul.f32 %v1090, %v1103
        %v1127 = vmul.f32 %v1091, %v1103
        %v1128 = vmul.f32 %v1092, %v1103
        %v1129 = vmul.f32 %v1093, %v1103
        %v1130 = vmul.f32 %v1094, %v1103
        %v1131 = vmul.f32 %v1095, %v1103
        %v1132 = vmul.f32 %v1096, %v1103
        %v1133 = vmul.f32 %v1097, %v1103
        %v1134 = vmul.f32 %v1098, %v1103
        %v1135 = vmul.f32 %v1099, %v1103
        %v1136 = vadd.f32 %v1036, %v1104
        %v1137 = vadd.f32 %v1037, %v1105
        %v1138 = vadd.f32 %v1038, %v1106
        %v1139 = vadd.f32 %v1039, %v1107
        %v1140 = vadd.f32 %v1040, %v1108
        %v1141 = vadd.f32 %v1041, %v1109
        %v1142 = vadd.f32 %v1042, %v1110
        %v1143 = vadd.f32 %v1043, %v1111
        %v1144 = vadd.f32 %v1044, %v1112
        %v1145 = vadd.f32 %v1045, %v1113
        %v1146 = vadd.f32 %v1046, %v1114
        %v1147 = vadd.f32 %v1047, %v1115
        %v1148 = vadd.f32 %v1048, %v1116
        %v1149 = vadd.f32 %v1049, %v1117
        %v1150 = vadd.f32 %v1050, %v1118
        %v1151 = vadd.f32 %v1051, %v1119
        %v1152 = vadd.f32 %v1052, %v1120
        %v1153 = vadd.f32 %v1053, %v1121
        %v1154 = vadd.f32 %v1054, %v1122
        %v1155 = vadd.f32 %v1055, %v1123
        %v1156 = vadd.f32 %v1056, %v1124
        %v1157 = vadd.f32 %v1057, %v1125
        %v1158 = vadd.f32 %v1058, %v1126
        %v1159 = vadd.f32 %v1059, %v1127
        %v1160 = vadd.f32 %v1060, %v1128
        %v1161 = vadd.f32 %v1061, %v1129
        %v1162 = vadd.f32 %v1062, %v1130
        %v1163 = vadd.f32 %v1063, %v1131
        %v1164 = vadd.f32 %v1064, %v1132
        %v1165 = vadd.f32 %v1065, %v1133
        %v1166 = vadd.f32 %v1066, %v1134
        %v1167 = vadd.f32 %v1067, %v1135
        %1168 = vst [vmem:[%s209] sm:$0xff] %v1136
        %1169 = vst [vmem:[%s209 + $0x8] sm:$0xff] %v1137
        %1170 = vst [vmem:[%s209 + $0x10] sm:$0xff] %v1138
        %1171 = vst [vmem:[%s209 + $0x18] sm:$0xff] %v1139
        %1172 = vst [vmem:[%s209 + $0x20] sm:$0xff] %v1140
        %1173 = vst [vmem:[%s209 + $0x28] sm:$0xff] %v1141
        %1174 = vst [vmem:[%s209 + $0x30] sm:$0xff] %v1142
        %1175 = vst [vmem:[%s209 + $0x38] sm:$0xff] %v1143
        %1176 = vst [vmem:[%s209 + $0x40] sm:$0xff] %v1144
        %1177 = vst [vmem:[%s209 + $0x48] sm:$0xff] %v1145
        %1178 = vst [vmem:[%s209 + $0x50] sm:$0xff] %v1146
        %1179 = vst [vmem:[%s209 + $0x58] sm:$0xff] %v1147
        %1180 = vst [vmem:[%s209 + $0x60] sm:$0xff] %v1148
        %1181 = vst [vmem:[%s209 + $0x68] sm:$0xff] %v1149
        %1182 = vst [vmem:[%s209 + $0x70] sm:$0xff] %v1150
        %1183 = vst [vmem:[%s209 + $0x78] sm:$0xff] %v1151
        %1184 = vst [vmem:[%s209 + $0x80] sm:$0xff] %v1152
        %1185 = vst [vmem:[%s209 + $0x88] sm:$0xff] %v1153
        %1186 = vst [vmem:[%s209 + $0x90] sm:$0xff] %v1154
        %1187 = vst [vmem:[%s209 + $0x98] sm:$0xff] %v1155
        %1188 = vst [vmem:[%s209 + $0xa0] sm:$0xff] %v1156
        %1189 = vst [vmem:[%s209 + $0xa8] sm:$0xff] %v1157
        %1190 = vst [vmem:[%s209 + $0xb0] sm:$0xff] %v1158
        %1191 = vst [vmem:[%s209 + $0xb8] sm:$0xff] %v1159
        %1192 = vst [vmem:[%s209 + $0xc0] sm:$0xff] %v1160
        %1193 = vst [vmem:[%s209 + $0xc8] sm:$0xff] %v1161
        %1194 = vst [vmem:[%s209 + $0xd0] sm:$0xff] %v1162
        %1195 = vst [vmem:[%s209 + $0xd8] sm:$0xff] %v1163
        %1196 = vst [vmem:[%s209 + $0xe0] sm:$0xff] %v1164
        %1197 = vst [vmem:[%s209 + $0xe8] sm:$0xff] %v1165
        %1198 = vst [vmem:[%s209 + $0xf0] sm:$0xff] %v1166
        %1199 = vst [vmem:[%s209 + $0xf8] sm:$0xff] %v1167
        %s1200 = sand.u32 %s119, 1
        %s1201 = scalar_lea.sflag [#allocation3], %s1200
        %s1202 = sand.u32 %s119, 1
        %s1203 = smul.addr %s1202, 256
        %s1204 = scalar_lea.vmem [#allocation2], %s1203
        // Predicated region
        $region33: #{tpu_custom_call.1} parent=31 // pred_check
          %p1205 = pneg %p129
        $region34: #{tpu_custom_call.1} parent=31 // pred_check_branch
          %1207 = sbr.rel (%p1205) target = $region36
        $region35: #{tpu_custom_call.1} parent=31 // pred_region
          %s1209 = ssub.s32 4096, 4096
          %1210 = vsyncadd %s1201, %s1209
          %s1211 = smul.addr %s21, 32
          %s1212 = sadd.s32 %s22, %s1211
          %s1213 = smul.addr %s1212, 128
          %s1214 = scalar_lea.hbm %s3, %s1213
          %s1215 = sshll.u32 %s1204, 4
          %s1216 = int_to_ptr.vmem [resolvable:$true] %s1215
          %1221 = dma.vmem_to_hbm [thread:$0]  %s1216, 4096, %s1214, %s1201, 128, 128, 8
        $region36: #{tpu_custom_call.1} parent=31 // pred_fallthru
          _
      $region32: #{tpu_custom_call.1} parent=5 // pred_fallthru
        _
      %p1222 = scmp.le.s32.totalorder 2, %s12
      // Predicated region
      $region37: #{tpu_custom_call.1} parent=5 // pred_check
        %p1223 = pneg %p1222
      $region38: #{tpu_custom_call.1} parent=5 // pred_check_branch
        %1225 = sbr.rel (%p1223) target = $region40
      $region39: #{tpu_custom_call.1} parent=5 // pred_region
        %s1226 = ssub.s32 %s12, 2
        // Predicated region
        $region41: #{tpu_custom_call.1} parent=39 // pred_check
          %p1227 = pneg %p135
        $region42: #{tpu_custom_call.1} parent=39 // pred_check_branch
          %1229 = sbr.rel (%p1227) target = $region44
        $region43: #{tpu_custom_call.1} parent=39 // pred_region
          %s1230 = sand.u32 %s120, 1
          %s1231 = scalar_lea.sflag [#allocation3], %s1230
          %s1232 = sand.u32 %s120, 1
          %s1233 = smul.addr %s1232, 256
          %s1234 = scalar_lea.vmem [#allocation2], %s1233
          %1235 = dma.done %s1231, 4096
        $region44: #{tpu_custom_call.1} parent=39 // pred_fallthru
          _
      $region40: #{tpu_custom_call.1} parent=5 // pred_fallthru
        _
    $region6: #{tpu_custom_call.1} parent=1 // loop_footer
      %s16 = sadd.s32 1, %s12
    $region7: #{tpu_custom_call.1} parent=1 // loop_footer_branch
      %11 = sbr.rel target = $region3
    $region8: #{tpu_custom_call.1} parent=1 // loop_exit
      _
    %1236 = vsyncpa [#allocation3], 1
    %s1237 = scalar_lea.sflag [#allocation3], 1
    %1238 = vsyncpa %s1237, 1

</llo_original>
